<compile_context>
chip_gen: v7x
topology: tpu7x:2x2x1
jax: 0.10.0
libtpu: 0.0.40
codegen_flags: <defaults>
</compile_context>

<pallas_src>
import functools
import math

import jax
import jax.numpy as jnp
from jax import lax
from jax.experimental import pallas as pl
from jax.experimental.pallas import tpu as pltpu


# --------------------------------------------------------------------------
# Pass 1: L2-normalize rows and fold sqrt(1/tau) into the values.
# --------------------------------------------------------------------------
def _normalize_kernel(x_ref, xn_ref, *, scale: float):
    x = x_ref[...].astype(jnp.float32)
    # Cosine normalization; clamp the norm at 1e-12 (i.e. sq-norm at 1e-24).
    inv_norm = lax.rsqrt(jnp.maximum(jnp.sum(x * x, axis=-1, keepdims=True), 1e-24))
    xn_ref[...] = (x * (inv_norm * jnp.float32(scale))).astype(xn_ref.dtype)


# --------------------------------------------------------------------------
# Pass 2: streamed exp-similarity row sums + positive-pair similarity.
# --------------------------------------------------------------------------
def _simclr_kernel(q_ref, p_ref, k_ref, loss_ref, spos_ref, rsum_ref,
                   *, inv_temp: float):
    """One (row_tile, col_tile) step of the streamed SimCLR loss.

    q_ref : (TM, D) normalized, sqrt(1/tau)-scaled query rows (j-invariant)
    p_ref : (TM, D) normalized, scaled positive-partner rows  (j-invariant)
    k_ref : (TN, D) normalized, scaled key rows (streamed along reduction axis)
    loss_ref : (TM, 1) per-sample loss (written at the last column step)
    spos_ref : (TM, 1) positive-pair similarity, already divided by tau
    rsum_ref : (TM, 1) running row-sum of exp(sims)
    """
    j = pl.program_id(1)

    @pl.when(j == 0)
    def _init():
        q = q_ref[...].astype(jnp.float32)
        p = p_ref[...].astype(jnp.float32)
        # Both operands already carry sqrt(1/tau) -> q.p == cos / tau.
        spos_ref[...] = jnp.sum(q * p, axis=-1, keepdims=True)
        rsum_ref[...] = jnp.zeros_like(rsum_ref)

    # sims = q @ k.T without materializing a transpose: contract D of both.
    sims = lax.dot_general(
        q_ref[...], k_ref[...],
        dimension_numbers=(((1,), (1,)), ((), ())),
        preferred_element_type=jnp.float32)            # (TM, TN) == cos / tau
    rsum_ref[...] += jnp.sum(jnp.exp(sims), axis=-1, keepdims=True)

    @pl.when(j == pl.num_programs(1) - 1)
    def _finalize():
        # Self-similarity is analytically cos(x, x)/tau = 1/tau -> exp(1/tau).
        self_sim = jnp.float32(math.exp(inv_temp))
        # -log(exp(s_pos) / (row_sum - self)) = log(row_sum - self) - s_pos
        loss_ref[...] = jnp.log(rsum_ref[...] - self_sim) - spos_ref[...]


def _pick_tile(total: int, preferred: int) -> int:
    """Largest tile <= preferred that divides `total` and is a multiple of 8
    (or the full extent), satisfying TPU sublane tiling rules."""
    if total <= preferred:
        return total
    for t in range(min(preferred, total), 7, -1):
        if total % t == 0 and t % 8 == 0:
            return t
    return total  # fall back to a single (full-extent) tile


def simclr_loss_naive(x: jax.Array, temperature: float,
                      similarity: str = "cos", *,
                      block_rows: int = 256, block_cols: int = 512,
                      matmul_dtype=None) -> jax.Array:
    """Pallas TPU implementation of _SimClrLossNaive.forward.

    matmul_dtype: None (default) keeps f32 MXU operands (faithful to the f32
    reference); pass jnp.bfloat16 for the fast MXU path (f32 accumulation).
    """
    if similarity not in ("cos", "dot"):
        raise NotImplementedError(
            f"Only ['cos', 'dot'] supported. Found: {similarity}")
    # NOTE: the reference forward always uses CosineSim regardless of `sim`.
    if x.ndim != 2:
        raise ValueError(f"Expected 2-D input. Found: {x.ndim}-D.")
    two_n, d = x.shape
    if two_n % 2 != 0:
        raise ValueError(f"Number of samples must be even. Found: {two_n}")
    n_pos = two_n // 2

    inv_temp = 1.0 / float(temperature)
    mm_dtype = jnp.float32 if matmul_dtype is None else matmul_dtype

    # ---------------- Pass 1: normalize + scale once ----------------
    tr = _pick_tile(two_n, 1024)
    xn = pl.pallas_call(
        functools.partial(_normalize_kernel, scale=math.sqrt(inv_temp)),
        out_shape=jax.ShapeDtypeStruct((two_n, d), mm_dtype),
        grid_spec=pltpu.PrefetchScalarGridSpec(
            num_scalar_prefetch=0,
            grid=(two_n // tr,),
            in_specs=[pl.BlockSpec((tr, d), lambda i: (i, 0))],
            out_specs=pl.BlockSpec((tr, d), lambda i: (i, 0))),
        compiler_params=pltpu.CompilerParams(
            dimension_semantics=("parallel",),
            vmem_limit_bytes=64 * 1024 * 1024),
    )(x)

    # ---------------- Pass 2: streamed loss ----------------
    tm = _pick_tile(two_n, block_rows)
    tn = _pick_tile(two_n, block_cols)
    grid = (two_n // tm, two_n // tn)

    if n_pos % tm == 0:
        # Partner rows (i + N) mod 2N of a row block are exactly another row
        # block: select them via the index_map, no extra HBM copy.
        shift_blocks = n_pos // tm
        num_row_blocks = two_n // tm
        p_input = xn
        p_spec = pl.BlockSpec(
            (tm, d), lambda i, j: ((i + shift_blocks) % num_row_blocks, 0))
    else:
        # Row block straddles the roll boundary: materialize one rolled copy
        # of the (already normalized) array instead.
        p_input = jnp.roll(xn, shift=-n_pos, axis=0)
        p_spec = pl.BlockSpec((tm, d), lambda i, j: (i, 0))

    kernel = functools.partial(_simclr_kernel, inv_temp=inv_temp)

    per_sample = pl.pallas_call(
        kernel,
        out_shape=jax.ShapeDtypeStruct((two_n, 1), jnp.float32),
        grid_spec=pltpu.PrefetchScalarGridSpec(
            num_scalar_prefetch=0,
            grid=grid,
            in_specs=[
                pl.BlockSpec((tm, d), lambda i, j: (i, 0)),   # query rows
                p_spec,                                       # positive partners
                pl.BlockSpec((tn, d), lambda i, j: (j, 0)),   # streamed key rows
            ],
            out_specs=pl.BlockSpec((tm, 1), lambda i, j: (i, 0)),
            scratch_shapes=[
                pltpu.VMEM((tm, 1), jnp.float32),   # positive-pair sim / tau
                pltpu.VMEM((tm, 1), jnp.float32),   # running row-sum of exp(sims)
            ]),
        compiler_params=pltpu.CompilerParams(
            dimension_semantics=("parallel", "arbitrary"),
            vmem_limit_bytes=64 * 1024 * 1024),
    )(xn, p_input, xn)

    # Final mean over 2N per-sample losses (trivial O(2N) reduction).
    return jnp.mean(per_sample)


def _reference_simclr_loss(x: jax.Array, temperature: float) -> jax.Array:
    """Pure-JAX reference mirroring the PyTorch module, for validation."""
    x = x.astype(jnp.float32)
    two_n = x.shape[0]
    n = two_n // 2
    xn = x / jnp.maximum(jnp.linalg.norm(x, axis=-1, keepdims=True), 1e-12)
    e = jnp.exp(xn @ xn.T / temperature)
    idx = jnp.arange(two_n)
    pos = e[idx, (idx + n) % two_n]
    self_sim = e[idx, idx]
    tot = e.sum(axis=1)
    return jnp.mean(-jnp.log(pos / (tot - self_sim)))


if __name__ == "__main__":
    key = jax.random.PRNGKey(0)
    k1, k2 = jax.random.split(key)
    temperature = 0.5

    # Case 1: small shape implied by the module (2N = 8 samples, hidden D = 32).
    # Single row block (tm == 2N) -> exercises the rolled-partner fallback.
    x_small = jax.random.normal(k1, (8, 32), dtype=jnp.float32)
    loss = simclr_loss_naive(x_small, temperature)
    jax.block_until_ready(loss)
    ref = _reference_simclr_loss(x_small, temperature)
    assert jnp.allclose(loss, ref, rtol=1e-4, atol=1e-4), (loss, ref)

    # Case 2: multi-tile streaming path with the shifted-block partner trick.
    x_med = jax.random.normal(k2, (64, 128), dtype=jnp.float32)
    loss_t = simclr_loss_naive(x_med, temperature, block_rows=16, block_cols=32)
    jax.block_until_ready(loss_t)
    ref_t = _reference_simclr_loss(x_med, temperature)
    assert jnp.allclose(loss_t, ref_t, rtol=1e-4, atol=1e-4), (loss_t, ref_t)

    # Case 3: bf16 MXU operands (fast path on v5e/v6e/v7x), f32 accumulation.
    loss_bf16 = simclr_loss_naive(x_med, temperature, block_rows=16,
                                  block_cols=32, matmul_dtype=jnp.bfloat16)
    jax.block_until_ready(loss_bf16)
    rel_err = float(jnp.abs(loss_bf16 - ref_t) / jnp.abs(ref_t))
    assert rel_err < 0.1, (loss_bf16, ref_t, rel_err)

    print("KERNEL_OK")
</pallas_src>

<mosaic_0001>
module attributes {stable_mosaic.version = 11 : i64} {
  func.func @_normalize_kernel(%arg0: i32, %arg1: memref<8x32xf32, #tpu.memory_space<vmem>>, %arg2: memref<8x32xf32, #tpu.memory_space<vmem>>) attributes {dimension_semantics = [#tpu.dimension_semantics<parallel>], iteration_bounds = array<i64: 1>, scalar_prefetch = 0 : i64, scratch_operands = 0 : i64, tpu.core_type = #tpu.core_type<tc>, window_params = [{transform_indices = @transform_0, window_bounds = array<i64: 8, 32>}, {transform_indices = @transform_1, window_bounds = array<i64: 8, 32>}]} {
    %c0 = arith.constant 0 : index
    %c0_0 = arith.constant 0 : index
    %0 = vector.load %arg1[%c0, %c0_0] : memref<8x32xf32, #tpu.memory_space<vmem>>, vector<8x32xf32>
    %1 = arith.mulf %0, %0 : vector<8x32xf32>
    %cst = arith.constant dense<0.000000e+00> : vector<8xf32>
    %2 = vector.multi_reduction <add>, %1, %cst [1] : vector<8x32xf32> to vector<8xf32>
    %3 = vector.shape_cast %2 : vector<8xf32> to vector<8x1xf32>
    %cst_1 = arith.constant 1.000000e-24 : f32
    %4 = vector.broadcast %cst_1 : f32 to vector<8x1xf32>
    %5 = arith.maximumf %3, %4 : vector<8x1xf32>
    %6 = math.rsqrt %5 : vector<8x1xf32>
    %cst_2 = arith.constant 1.41421354 : f32
    %7 = vector.broadcast %cst_2 : f32 to vector<8x1xf32>
    %8 = arith.mulf %6, %7 : vector<8x1xf32>
    %9 = vector.broadcast %8 : vector<8x1xf32> to vector<8x32xf32>
    %10 = arith.mulf %0, %9 : vector<8x32xf32>
    %c0_3 = arith.constant 0 : index
    %c0_4 = arith.constant 0 : index
    %11 = vector.load %arg2[%c0_3, %c0_4] : memref<8x32xf32, #tpu.memory_space<vmem>>, vector<8x32xf32>
    tpu.vector_store %arg2[%c0_3, %c0_4], %10 {strides = array<i32>} : memref<8x32xf32, #tpu.memory_space<vmem>>, vector<8x32xf32>,
    return
  }
  func.func @transform_0(%arg0: i32) -> (i32, i32) {
    %c0_i32 = arith.constant 0 : i32
    %c0_i32_0 = arith.constant 0 : i32
    return %arg0, %c0_i32 : i32, i32
  }
  func.func @transform_1(%arg0: i32) -> (i32, i32) {
    %c0_i32 = arith.constant 0 : i32
    %c0_i32_0 = arith.constant 0 : i32
    return %arg0, %c0_i32 : i32, i32
  }
}

</mosaic_0001>

<llo_original>
// kernel: tpu_custom_call.1
$region0: #{tpu_custom_call.1}
  #allocation0 [shape = 'u32[]', space=smem, size = 0x4, offset = 0x4, fixed_abs, tag = 'smem constant byte address 0x4 - core index']
  #allocation1 [shape = 'u32[144,128]{1,0:T(1,128)}', space=vmem, size = 0x12000, scoped, tag = 'internal scratch']
  %s0 = inlined_call_operand.hbm [shape: f32[8,32], index: 0, kind: input, shape index: {}]
  %s1 = inlined_call_operand.hbm [shape: f32[8,32], index: 1, kind: output, shape index: {}]
  %s2 = sld [smem:[#allocation0]]
  $region18: #{tpu_custom_call.1} parent=0
    _
  %s4 = ssub.s32 1, %s2
  %s5 = scalar_select 0, %s4, %s2
  $region1: #{tpu_custom_call.1} parent=0
    #allocation2 [shape = 'u8[4096]{0}', space=vmem, size = 0x1000, scoped, tag = 'input window, operand 0, single buffered']
    #allocation3 [shape = 's32[1]{0}', space=sflag, size = 0x4, scoped, tag = 'scoped memory for tpu_custom_call.1']
    #allocation4 [shape = 's32[1]{0}', space=sflag, size = 0x4, scoped, tag = 'scoped memory for tpu_custom_call.1']
    #allocation5 [shape = 'u8[4096]{0}', space=vmem, size = 0x1000, scoped, tag = 'output window, operand 0, single buffered']
    %6 = vsyncpa [#allocation3], 0
    %7 = vsyncpa [#allocation4], 0
    // Predicated region
    $region2: #{tpu_custom_call.1} parent=1 // pred_check
      _
    $region3: #{tpu_custom_call.1} parent=1 // pred_check_branch
      %9 = sbr.rel (0) target = $region5
    $region4: #{tpu_custom_call.1} parent=1 // pred_region
      %s11 = ssub.s32 128, 128
      %12 = vsyncadd [#allocation3], %s11
      %s14 = sshll.u32 [#allocation2], 4
      %s15 = int_to_ptr.vmem [resolvable:$true] %s14
      %17 = dma.hbm_to_vmem [thread:$0]  %s0, 128, %s15, [#allocation3]
    $region5: #{tpu_custom_call.1} parent=1 // pred_fallthru
      _
    // Predicated region
    $region6: #{tpu_custom_call.1} parent=1 // pred_check
      _
    $region7: #{tpu_custom_call.1} parent=1 // pred_check_branch
      %19 = sbr.rel (0) target = $region9
    $region8: #{tpu_custom_call.1} parent=1 // pred_region
      %20 = dma.done [#allocation3], 128
    $region9: #{tpu_custom_call.1} parent=1 // pred_fallthru
      _
    %v21 = vld [vmem:[#allocation2] sm:$0xff]
    %v22 = vmul.f32 %v21, %v21
    %vm23 = vcmask 261120
    %v24 = vsel %vm23, %v22, 0.0
    %25 = vadd.xlane.f32.xlu0 %v24
    %v26 = vpop.xlane.xlu0 %25
    %v27 = vmax.f32 %v26, 1e-24
    %v28 = vrsqrt.pop %v27
    %v29 = vmul.f32 %v28, 1.4142135
    %v30 = vmul.f32 %v21, %v29
    %31 = vst.msk [vmem:[#allocation5] sm:$0xff] %vm23, %v30
    // Predicated region
    $region10: #{tpu_custom_call.1} parent=1 // pred_check
      _
    $region11: #{tpu_custom_call.1} parent=1 // pred_check_branch
      %33 = sbr.rel (0) target = $region13
    $region12: #{tpu_custom_call.1} parent=1 // pred_region
      %s35 = ssub.s32 128, 128
      %36 = vsyncadd [#allocation4], %s35
      %s38 = sshll.u32 [#allocation5], 4
      %s39 = int_to_ptr.vmem [resolvable:$true] %s38
      %41 = dma.vmem_to_hbm [thread:$0]  %s39, 128, %s1, [#allocation4]
    $region13: #{tpu_custom_call.1} parent=1 // pred_fallthru
      _
    // Predicated region
    $region14: #{tpu_custom_call.1} parent=1 // pred_check
      _
    $region15: #{tpu_custom_call.1} parent=1 // pred_check_branch
      %43 = sbr.rel (0) target = $region17
    $region16: #{tpu_custom_call.1} parent=1 // pred_region
      %44 = dma.done [#allocation4], 128
    $region17: #{tpu_custom_call.1} parent=1 // pred_fallthru
      _
    %45 = vsyncpa [#allocation3], 1
    %46 = vsyncpa [#allocation4], 1

</llo_original>
